<compile_context>
chip_gen: v7x
topology: tpu7x:2x2x1
jax: 0.10.0
libtpu: 0.0.40
codegen_flags: <defaults>
</compile_context>

<pallas_src>
import functools

import jax
import jax.numpy as jnp
from jax import lax
from jax.experimental import pallas as pl
from jax.experimental.pallas import tpu as pltpu

_LANE = 128


def _cdiv(a, b):
    return (a + b - 1) // b


def _round_up(a, b):
    return _cdiv(a, b) * b


def _spectral_filter_kernel(filt_ref, rim_ref, out_ref, *, log):
    """Elementwise spectral filtering (the hot path of LinearFourier2d.forward).

    filt_ref : (tile_rows, 128)        lane-dense fourier_filter tile (zero padded)
    rim_ref  : (1, 2, tile_rows, 128)  stacked [real, imag] of the rFFT of x
    out_ref  : (1, 2, tile_rows, 128)  filtered [real, imag], same layout
    """
    w = jnp.maximum(filt_ref[...], 0.0)           # ReLU(fourier_filter)
    re = rim_ref[0, 0]
    im = rim_ref[0, 1]
    if log:
        # spectrum = exp(w * log1p(mag)) - 1 ; scale = spectrum / mag.
        # Fuse sqrt + reciprocal into one rsqrt (one fewer EUP transcendental);
        # zero-padded bins give s=0, w=0 -> spectrum=0 -> scale=0 (no NaN).
        s = re * re + im * im
        inv = lax.rsqrt(s + 1e-30)                # ~ 1 / mag
        mag = s * inv                             # ~ sqrt(s)
        spectrum = jnp.exp(w * jnp.log1p(mag)) - 1.0
        scale = spectrum * inv
        out_ref[0, 0] = re * scale
        out_ref[0, 1] = im * scale
    else:
        # spectrum = w * mag ; scale = w*mag/(mag+1e-16) == w to f32 precision,
        # so the linear path needs no transcendentals at all.
        out_ref[0, 0] = w * re
        out_ref[0, 1] = w * im


def linear_fourier2d(x, fourier_filter, *, log, tile_rows_target=2048):
    """Equivalent of LinearFourier2d.forward.

    x              : (B, C, H, W) float32   (NCHW, same as PyTorch)
    fourier_filter : (C, H, W//2 + 1) float32
    returns        : (B, C, H, W) float32
    """
    B, C, H, W = x.shape
    Wh = W // 2 + 1
    assert fourier_filter.shape == (C, H, Wh)

    # ---- lane-dense layout bookkeeping --------------------------------------
    M = C * H * Wh                                 # flat spectral extent / batch
    rows = _cdiv(M, _LANE)
    rows8 = _round_up(rows, 8)                     # pad rows only to multiple of 8
    num_tiles = max(1, _cdiv(rows8, tile_rows_target))
    if B * num_tiles < 2:                          # keep both v7x TCs busy
        num_tiles = 2
    tile_rows = _round_up(_cdiv(rows8, num_tiles), 8)
    rows_padded = tile_rows * num_tiles            # padding bounded, not ~tile_rows
    m_padded = rows_padded * _LANE
    pad = m_padded - M

    # ---- rFFT (stays in XLA) -------------------------------------------------
    rft = jnp.fft.rfftn(x, axes=(1, 2, 3), norm="ortho")  # (B, C, H, Wh) complex64

    # Real/imag split + zero pad + lane-dense reshape in one stacked pass.
    rim = jnp.stack([jnp.real(rft), jnp.imag(rft)], axis=1).astype(jnp.float32)
    rim = rim.reshape(B, 2, M)
    if pad:
        rim = jnp.pad(rim, ((0, 0), (0, 0), (0, pad)))
    rim = rim.reshape(B, 2, rows_padded, _LANE)

    filt = fourier_filter.astype(jnp.float32).reshape(M)
    if pad:
        filt = jnp.pad(filt, (0, pad))             # padded bins -> w = 0
    filt = filt.reshape(rows_padded, _LANE)

    # ---- Pallas spectral filter ---------------------------------------------
    kernel = functools.partial(_spectral_filter_kernel, log=log)
    out = pl.pallas_call(
        kernel,
        out_shape=jax.ShapeDtypeStruct((B, 2, rows_padded, _LANE), jnp.float32),
        grid_spec=pltpu.PrefetchScalarGridSpec(
            num_scalar_prefetch=0,
            # batch innermost: the filter tile (index depends only on r) stays
            # VMEM-resident across the inner batch loop.
            grid=(num_tiles, B),
            in_specs=[
                pl.BlockSpec((tile_rows, _LANE), lambda r, b: (r, 0)),
                pl.BlockSpec((1, 2, tile_rows, _LANE), lambda r, b: (b, 0, r, 0)),
            ],
            out_specs=pl.BlockSpec((1, 2, tile_rows, _LANE),
                                   lambda r, b: (b, 0, r, 0)),
        ),
        # Donate the stacked re/im buffer to the output (same shape/dtype,
        # elementwise op) -> one fewer full-size HBM allocation.
        input_output_aliases={1: 0},
        compiler_params=pltpu.CompilerParams(
            dimension_semantics=("parallel", "parallel"),
            vmem_limit_bytes=32 * 1024 * 1024,
        ),
    )(filt, rim)

    # ---- recombine + inverse FFT (stays in XLA) ------------------------------
    out = out.reshape(B, 2, m_padded)[:, :, :M].reshape(B, 2, C, H, Wh)
    filtered = lax.complex(out[:, 0], out[:, 1])
    irf = jnp.fft.irfftn(filtered, s=(C, H, W), axes=(1, 2, 3), norm="ortho")
    return irf.astype(x.dtype)


def _linear_fourier2d_ref(x, fourier_filter, *, log):
    """Pure-JAX reference matching the PyTorch module exactly."""
    w = jnp.maximum(fourier_filter, 0.0)[None]     # repeat over batch
    rft = jnp.fft.rfftn(x, axes=(1, 2, 3), norm="ortho")
    re, im = jnp.real(rft), jnp.imag(rft)
    mag = jnp.sqrt(re * re + im * im)
    if log:
        spectrum = jnp.exp(w * jnp.log1p(mag)) - 1.0
    else:
        spectrum = w * mag
    scale = spectrum / (mag + 1e-16)
    filtered = lax.complex(re * scale, im * scale)
    return jnp.fft.irfftn(filtered, s=x.shape[1:], axes=(1, 2, 3),
                          norm="ortho").astype(x.dtype)


if __name__ == "__main__":
    B, C, H, W = 2, 4, 16, 16
    key = jax.random.PRNGKey(0)
    kx, kf = jax.random.split(key)
    x = jax.random.normal(kx, (B, C, H, W), dtype=jnp.float32)

    # Module init is ones_; also test a non-trivial filter (exercises ReLU too).
    filt_ones = jnp.ones((C, H, W // 2 + 1), dtype=jnp.float32)
    filt_rand = 1.0 + 0.5 * jax.random.normal(kf, (C, H, W // 2 + 1),
                                              dtype=jnp.float32)

    fwd = jax.jit(linear_fourier2d, static_argnames=("log", "tile_rows_target"))

    out_lin_ones = jax.block_until_ready(fwd(x, filt_ones, log=False))
    out_log_rand = jax.block_until_ready(fwd(x, filt_rand, log=True))
    out_lin_rand = jax.block_until_ready(fwd(x, filt_rand, log=False))

    assert out_lin_ones.shape == x.shape
    # Ones-initialized filter + linear path is (numerically) an identity map.
    assert jnp.allclose(out_lin_ones, x, atol=1e-3, rtol=1e-3)
    # Compare against the pure-JAX reference implementation of the module.
    ref_log = _linear_fourier2d_ref(x, filt_rand, log=True)
    ref_lin = _linear_fourier2d_ref(x, filt_rand, log=False)
    assert jnp.allclose(out_log_rand, ref_log, atol=2e-2, rtol=2e-2)
    assert jnp.allclose(out_lin_rand, ref_lin, atol=2e-2, rtol=2e-2)

    print("KERNEL_OK")
</pallas_src>

<mosaic_0001>
module attributes {stable_mosaic.version = 11 : i64} {
  func.func @_spectral_filter_kernel(%arg0: i32, %arg1: i32, %arg2: memref<8x128xf32, #tpu.memory_space<vmem>>, %arg3: memref<1x2x8x128xf32, #tpu.memory_space<vmem>>, %arg4: memref<1x2x8x128xf32, #tpu.memory_space<vmem>>) attributes {dimension_semantics = [#tpu.dimension_semantics<parallel>, #tpu.dimension_semantics<parallel>], iteration_bounds = array<i64: 1, 2>, scalar_prefetch = 0 : i64, scratch_operands = 0 : i64, tpu.core_type = #tpu.core_type<tc>, window_params = [{transform_indices = @transform_0, window_bounds = array<i64: 8, 128>}, {transform_indices = @transform_1, window_bounds = array<i64: 1, 2, 8, 128>}, {transform_indices = @transform_2, window_bounds = array<i64: 1, 2, 8, 128>}]} {
    %c0 = arith.constant 0 : index
    %c0_0 = arith.constant 0 : index
    %0 = vector.load %arg2[%c0, %c0_0] : memref<8x128xf32, #tpu.memory_space<vmem>>, vector<8x128xf32>
    %cst = arith.constant 0.000000e+00 : f32
    %1 = vector.broadcast %cst : f32 to vector<8x128xf32>
    %2 = arith.maximumf %0, %1 : vector<8x128xf32>
    %c0_1 = arith.constant 0 : index
    %c0_2 = arith.constant 0 : index
    %c0_3 = arith.constant 0 : index
    %c0_4 = arith.constant 0 : index
    %3 = vector.load %arg3[%c0_1, %c0_2, %c0_3, %c0_4] : memref<1x2x8x128xf32, #tpu.memory_space<vmem>>, vector<1x1x8x128xf32>
    %4 = vector.shape_cast %3 : vector<1x1x8x128xf32> to vector<8x128xf32>
    %c0_5 = arith.constant 0 : index
    %c1 = arith.constant 1 : index
    %c0_6 = arith.constant 0 : index
    %c0_7 = arith.constant 0 : index
    %5 = vector.load %arg3[%c0_5, %c1, %c0_6, %c0_7] : memref<1x2x8x128xf32, #tpu.memory_space<vmem>>, vector<1x1x8x128xf32>
    %6 = vector.shape_cast %5 : vector<1x1x8x128xf32> to vector<8x128xf32>
    %7 = arith.mulf %2, %4 : vector<8x128xf32>
    %c0_8 = arith.constant 0 : index
    %c0_9 = arith.constant 0 : index
    %c0_10 = arith.constant 0 : index
    %c0_11 = arith.constant 0 : index
    %8 = vector.load %arg4[%c0_8, %c0_9, %c0_10, %c0_11] : memref<1x2x8x128xf32, #tpu.memory_space<vmem>>, vector<1x1x8x128xf32>
    %9 = vector.shape_cast %8 : vector<1x1x8x128xf32> to vector<8x128xf32>
    %10 = vector.shape_cast %7 : vector<8x128xf32> to vector<1x1x8x128xf32>
    tpu.vector_store %arg4[%c0_8, %c0_9, %c0_10, %c0_11], %10 {strides = array<i32>} : memref<1x2x8x128xf32, #tpu.memory_space<vmem>>, vector<1x1x8x128xf32>,
    %11 = arith.mulf %2, %6 : vector<8x128xf32>
    %c0_12 = arith.constant 0 : index
    %c1_13 = arith.constant 1 : index
    %c0_14 = arith.constant 0 : index
    %c0_15 = arith.constant 0 : index
    %12 = vector.load %arg4[%c0_12, %c1_13, %c0_14, %c0_15] : memref<1x2x8x128xf32, #tpu.memory_space<vmem>>, vector<1x1x8x128xf32>
    %13 = vector.shape_cast %12 : vector<1x1x8x128xf32> to vector<8x128xf32>
    %14 = vector.shape_cast %11 : vector<8x128xf32> to vector<1x1x8x128xf32>
    tpu.vector_store %arg4[%c0_12, %c1_13, %c0_14, %c0_15], %14 {strides = array<i32>} : memref<1x2x8x128xf32, #tpu.memory_space<vmem>>, vector<1x1x8x128xf32>,
    return
  }
  func.func @transform_0(%arg0: i32, %arg1: i32) -> (i32, i32) {
    %c0_i32 = arith.constant 0 : i32
    %c0_i32_0 = arith.constant 0 : i32
    return %arg0, %c0_i32 : i32, i32
  }
  func.func @transform_1(%arg0: i32, %arg1: i32) -> (i32, i32, i32, i32) {
    %c0_i32 = arith.constant 0 : i32
    %c0_i32_0 = arith.constant 0 : i32
    %c0_i32_1 = arith.constant 0 : i32
    return %arg1, %c0_i32, %arg0, %c0_i32_0 : i32, i32, i32, i32
  }
  func.func @transform_2(%arg0: i32, %arg1: i32) -> (i32, i32, i32, i32) {
    %c0_i32 = arith.constant 0 : i32
    %c0_i32_0 = arith.constant 0 : i32
    %c0_i32_1 = arith.constant 0 : i32
    return %arg1, %c0_i32, %arg0, %c0_i32_0 : i32, i32, i32, i32
  }
}

</mosaic_0001>

<llo_original>
// kernel: linear_fourier2d.1
$region0: #{linear_fourier2d.1}
  #allocation0 [shape = 'u32[]', space=smem, size = 0x4, offset = 0x4, fixed_abs, tag = 'smem constant byte address 0x4 - core index']
  #allocation1 [shape = 'u32[144,128]{1,0:T(1,128)}', space=vmem, size = 0x12000, scoped, tag = 'internal scratch']
  %s0 = inlined_call_operand.vmem [shape: f32[8,128], index: 0, kind: input, shape index: {}]
  %s1 = inlined_call_operand.vmem [shape: f32[2,2,8,128], index: 1, kind: input, shape index: {}, may-alias: {1,2}]
  %s2 = inlined_call_operand.vmem [shape: f32[2,2,8,128], index: 2, kind: output, shape index: {}, may-alias: {1,2}]
  %s3 = sld [smem:[#allocation0]]
  $region41: #{linear_fourier2d.1} parent=0
    _
  %s5 = ssub.s32 1, %s3
  %s6 = scalar_select 0, %s5, %s3
  loop: start=0, step=1, limit=4
  $region2: #{linear_fourier2d.1} parent=0 // loop_pre_header
    _
  $region3: #{linear_fourier2d.1} parent=0 // loop_header
    %s8 = sphi 0, %s12
    %p9 = scmp.ge.s32.totalorder %s8, 4
    %s15 = sphi 0, %s27
    %s16 = sphi 0, %s23
    %s17 = sphi 0, %s15
    %s18 = sphi 0, %s16
    %s19 = sphi 0, %s17
    %s20 = sphi 0, %s18
    %s30 = sphi 0, %s32
    %s33 = sphi 0, %s30
    %s34 = sphi 0, %s33
    %s50 = sphi 0, %s34
    %s58 = sphi 0, %s60
    %s61 = sphi 0, %s58
    %s62 = sphi 0, %s61
    %s78 = sphi 0, %s62
    %s86 = sphi 0, %s88
    %s89 = sphi 0, %s86
    %s90 = sphi 0, %s89
    %s106 = sphi 0, %s90
  $region4: #{linear_fourier2d.1} parent=0 // loop_header_branch
    %11 = sbr.rel (%p9) target = $region8
  $region5: #{linear_fourier2d.1} parent=0 // loop_body
    %s13 = ssub.s32 %s8, 1
    %s14 = ssub.s32 %s8, 2
    %s21 = sadd.s32 1, %s16
    %p22 = scmp.ge.s32.totalorder %s21, 2
    %s23 = scalar_select %p22, 0, %s21
    %s24 = sadd.s32 1, %s15
    %s25 = scalar_select %p22, %s24, %s15
    %p26 = scmp.ge.s32.totalorder %s25, 1
    %s27 = scalar_select %p26, 0, %s25
    %s28 = ssub.s32 %s15, %s27
    %p29 = scmp.eq.s32.totalorder %s28, 0
    %s31 = sadd.s32 %s30, 1
    %s32 = scalar_select %p29, %s30, %s31
    %p35 = pneg %p29
    %p36 = scmp.eq.s32.totalorder %s8, 1
    %p37 = por %p35, %p36
    %p38 = scmp.ne.s32.totalorder %s30, %s33
    %p39 = scmp.eq.s32.totalorder %s8, 0
    %p40 = por %p38, %p39
    %p41 = scmp.ne.s32.totalorder %s30, %s33
    %p42 = scmp.eq.s32.totalorder %s13, 1
    %p43 = por %p41, %p42
    %p44 = scmp.ne.s32.totalorder %s33, %s34
    %p45 = scmp.eq.s32.totalorder %s13, 0
    %p46 = por %p44, %p45
    %p47 = scmp.ne.s32.totalorder %s33, %s34
    %p48 = scmp.eq.s32.totalorder %s14, 1
    %p49 = por %p47, %p48
    %p51 = scmp.ne.s32.totalorder %s34, %s50
    %p52 = scmp.eq.s32.totalorder %s14, 0
    %p53 = por %p51, %p52
    %s54 = ssub.s32 %s16, %s23
    %s55 = ssub.s32 %s15, %s27
    %s56 = sor.u32 %s54, %s55
    %p57 = scmp.eq.s32.totalorder %s56, 0
    %s59 = sadd.s32 %s58, 1
    %s60 = scalar_select %p57, %s58, %s59
    %p63 = pneg %p57
    %p64 = scmp.eq.s32.totalorder %s8, 1
    %p65 = por %p63, %p64
    %p66 = scmp.ne.s32.totalorder %s58, %s61
    %p67 = scmp.eq.s32.totalorder %s8, 0
    %p68 = por %p66, %p67
    %p69 = scmp.ne.s32.totalorder %s58, %s61
    %p70 = scmp.eq.s32.totalorder %s13, 1
    %p71 = por %p69, %p70
    %p72 = scmp.ne.s32.totalorder %s61, %s62
    %p73 = scmp.eq.s32.totalorder %s13, 0
    %p74 = por %p72, %p73
    %p75 = scmp.ne.s32.totalorder %s61, %s62
    %p76 = scmp.eq.s32.totalorder %s14, 1
    %p77 = por %p75, %p76
    %p79 = scmp.ne.s32.totalorder %s62, %s78
    %p80 = scmp.eq.s32.totalorder %s14, 0
    %p81 = por %p79, %p80
    %s82 = ssub.s32 %s16, %s23
    %s83 = ssub.s32 %s15, %s27
    %s84 = sor.u32 %s82, %s83
    %p85 = scmp.eq.s32.totalorder %s84, 0
    %s87 = sadd.s32 %s86, 1
    %s88 = scalar_select %p85, %s86, %s87
    %p91 = pneg %p85
    %p92 = scmp.eq.s32.totalorder %s8, 1
    %p93 = por %p91, %p92
    %p94 = scmp.ne.s32.totalorder %s86, %s89
    %p95 = scmp.eq.s32.totalorder %s8, 0
    %p96 = por %p94, %p95
    %p97 = scmp.ne.s32.totalorder %s86, %s89
    %p98 = scmp.eq.s32.totalorder %s13, 1
    %p99 = por %p97, %p98
    %p100 = scmp.ne.s32.totalorder %s89, %s90
    %p101 = scmp.eq.s32.totalorder %s13, 0
    %p102 = por %p100, %p101
    %p103 = scmp.ne.s32.totalorder %s89, %s90
    %p104 = scmp.eq.s32.totalorder %s14, 1
    %p105 = por %p103, %p104
    %p107 = scmp.ne.s32.totalorder %s90, %s106
    %p108 = scmp.eq.s32.totalorder %s14, 0
    %p109 = por %p107, %p108
    %p110 = scmp.le.s32.totalorder 1, %s8
    %p111 = scmp.lt.s32.totalorder %s8, 3
    %p112 = pnand %p110, %p111
    %p113 = pneg %p112
    // Predicated region
    $region9: #{linear_fourier2d.1} parent=5 // pred_check
      _
    $region10: #{linear_fourier2d.1} parent=5 // pred_check_branch
      %115 = sbr.rel (%p112) target = $region12
    $region11: #{linear_fourier2d.1} parent=5 // pred_region
      %s116 = ssub.s32 %s8, 1
      // Predicated region
      $region13: #{linear_fourier2d.1} parent=11 // pred_check
        %p117 = pneg %p46
      $region14: #{linear_fourier2d.1} parent=11 // pred_check_branch
        %119 = sbr.rel (%p117) target = $region16
      $region15: #{linear_fourier2d.1} parent=11 // pred_region
        %p120 = scmp.lt.s32.totalorder %s17, 0
        %s121 = scalar_select %p120, %s17, 0
        %s122 = smul.addr %s121, 8
        %s123 = scalar_lea.vmem %s0, %s122
      $region16: #{linear_fourier2d.1} parent=11 // pred_fallthru
        _
    $region12: #{linear_fourier2d.1} parent=5 // pred_fallthru
      _
    %p124 = scmp.lt.s32.totalorder %s8, 2
    // Predicated region
    $region17: #{linear_fourier2d.1} parent=5 // pred_check
      %p125 = pneg %p124
    $region18: #{linear_fourier2d.1} parent=5 // pred_check_branch
      %127 = sbr.rel (%p125) target = $region20
    $region19: #{linear_fourier2d.1} parent=5 // pred_region
      // Predicated region
      $region21: #{linear_fourier2d.1} parent=19 // pred_check
        %p128 = pneg %p68
      $region22: #{linear_fourier2d.1} parent=19 // pred_check_branch
        %130 = sbr.rel (%p128) target = $region24
      $region23: #{linear_fourier2d.1} parent=19 // pred_region
        %p131 = scmp.lt.s32.totalorder %s16, 1
        %s132 = scalar_select %p131, %s16, 1
        %p133 = scmp.lt.s32.totalorder %s15, 0
        %s134 = scalar_select %p133, %s15, 0
        %s135 = smul.addr %s132, 2
        %s136 = sadd.s32 %s134, %s135
        %s137 = smul.addr %s136, 8
        %s138 = scalar_lea.vmem %s1, %s137
      $region24: #{linear_fourier2d.1} parent=19 // pred_fallthru
        _
    $region20: #{linear_fourier2d.1} parent=5 // pred_fallthru
      _
    %p139 = scmp.le.s32.totalorder 1, %s8
    %p140 = scmp.lt.s32.totalorder %s8, 3
    %p141 = pnand %p139, %p140
    %p142 = pneg %p141
    // Predicated region
    $region25: #{linear_fourier2d.1} parent=5 // pred_check
      _
    $region26: #{linear_fourier2d.1} parent=5 // pred_check_branch
      %144 = sbr.rel (%p141) target = $region28
    $region27: #{linear_fourier2d.1} parent=5 // pred_region
      %s145 = ssub.s32 %s8, 1
      %p146 = scmp.lt.s32.totalorder %s17, 0
      %s147 = scalar_select %p146, %s17, 0
      %s148 = smul.addr %s147, 8
      %s149 = scalar_lea.vmem %s0, %s148
      %p150 = pneg %p46
      %p151 = pneg %p43
      %p152 = scmp.lt.s32.totalorder %s18, 1
      %s153 = scalar_select %p152, %s18, 1
      %p154 = scmp.lt.s32.totalorder %s17, 0
      %s155 = scalar_select %p154, %s17, 0
      %s156 = smul.addr %s153, 2
      %s157 = sadd.s32 %s155, %s156
      %s158 = smul.addr %s157, 8
      %s159 = scalar_lea.vmem %s1, %s158
      %p160 = pneg %p74
      %p161 = pneg %p71
      %p162 = pneg %p102
      %p163 = pneg %p99
      %p164 = scmp.lt.s32.totalorder %s18, 1
      %s165 = scalar_select %p164, %s18, 1
      %p166 = scmp.lt.s32.totalorder %s17, 0
      %s167 = scalar_select %p166, %s17, 0
      %s168 = smul.addr %s165, 2
      %s169 = sadd.s32 %s167, %s168
      %s170 = smul.addr %s169, 8
      %s171 = scalar_lea.vmem %s2, %s170
      %p172 = scmp.lt.s32.totalorder %s17, 0
      %s173 = scalar_select %p172, %s17, 0
      %s174 = smul.addr %s173, 8
      %s175 = scalar_lea.vmem %s0, %s174
      %p176 = scmp.lt.s32.totalorder %s18, 1
      %s177 = scalar_select %p176, %s18, 1
      %p178 = scmp.lt.s32.totalorder %s17, 0
      %s179 = scalar_select %p178, %s17, 0
      %s180 = smul.addr %s177, 2
      %s181 = sadd.s32 %s179, %s180
      %s182 = smul.addr %s181, 8
      %s183 = scalar_lea.vmem %s1, %s182
      %p184 = scmp.lt.s32.totalorder %s18, 1
      %s185 = scalar_select %p184, %s18, 1
      %p186 = scmp.lt.s32.totalorder %s17, 0
      %s187 = scalar_select %p186, %s17, 0
      %s188 = smul.addr %s185, 2
      %s189 = sadd.s32 %s187, %s188
      %s190 = smul.addr %s189, 8
      %s191 = scalar_lea.vmem %s2, %s190
      %v192 = vld [vmem:[%s175] sm:$0xff]
      %v193 = vmax.f32 %v192, 0.0
      %v194 = vld [vmem:[%s183] sm:$0xff]
      %s195 = scalar_lea.vmem %s183, 8
      %v196 = vld [vmem:[%s195] sm:$0xff]
      %v197 = vmul.f32 %v193, %v194
      %198 = vst [vmem:[%s191] sm:$0xff] %v197
      %v199 = vmul.f32 %v193, %v196
      %s200 = scalar_lea.vmem %s191, 8
      %201 = vst [vmem:[%s200] sm:$0xff] %v199
      %p202 = scmp.lt.s32.totalorder %s18, 1
      %s203 = scalar_select %p202, %s18, 1
      %p204 = scmp.lt.s32.totalorder %s17, 0
      %s205 = scalar_select %p204, %s17, 0
      %s206 = smul.addr %s203, 2
      %s207 = sadd.s32 %s205, %s206
      %s208 = smul.addr %s207, 8
      %s209 = scalar_lea.vmem %s2, %s208
      // Predicated region
      $region29: #{linear_fourier2d.1} parent=27 // pred_check
        %p210 = pneg %p99
      $region30: #{linear_fourier2d.1} parent=27 // pred_check_branch
        %212 = sbr.rel (%p210) target = $region32
      $region31: #{linear_fourier2d.1} parent=27 // pred_region
        _
      $region32: #{linear_fourier2d.1} parent=27 // pred_fallthru
        _
    $region28: #{linear_fourier2d.1} parent=5 // pred_fallthru
      _
    %p213 = scmp.le.s32.totalorder 2, %s8
    // Predicated region
    $region33: #{linear_fourier2d.1} parent=5 // pred_check
      %p214 = pneg %p213
    $region34: #{linear_fourier2d.1} parent=5 // pred_check_branch
      %216 = sbr.rel (%p214) target = $region36
    $region35: #{linear_fourier2d.1} parent=5 // pred_region
      %s217 = ssub.s32 %s8, 2
      // Predicated region
      $region37: #{linear_fourier2d.1} parent=35 // pred_check
        %p218 = pneg %p105
      $region38: #{linear_fourier2d.1} parent=35 // pred_check_branch
        %220 = sbr.rel (%p218) target = $region40
      $region39: #{linear_fourier2d.1} parent=35 // pred_region
        %p221 = scmp.lt.s32.totalorder %s20, 1
        %s222 = scalar_select %p221, %s20, 1
        %p223 = scmp.lt.s32.totalorder %s19, 0
        %s224 = scalar_select %p223, %s19, 0
        %s225 = smul.addr %s222, 2
        %s226 = sadd.s32 %s224, %s225
        %s227 = smul.addr %s226, 8
        %s228 = scalar_lea.vmem %s2, %s227
      $region40: #{linear_fourier2d.1} parent=35 // pred_fallthru
        _
    $region36: #{linear_fourier2d.1} parent=5 // pred_fallthru
      _
  $region6: #{linear_fourier2d.1} parent=0 // loop_footer
    %s12 = sadd.s32 1, %s8
  $region7: #{linear_fourier2d.1} parent=0 // loop_footer_branch
    %7 = sbr.rel target = $region3
  $region8: #{linear_fourier2d.1} parent=0 // loop_exit
    _

// kernel: reverse.0
$region0: #{reverse.0}
  %s0 = inlined_call_operand.vmem [shape: f32[2,4,16,7], index: 0, kind: input, shape index: {}]
  %s1 = inlined_call_operand.vmem [shape: f32[2,4,16,7], index: 1, kind: output, shape index: {}]
  $region1: #{reverse.0} parent=0
    #allocation0 [shape = 'u8[65536]{0}', space=vmem, size = 0x10000, scoped, tag = 'operand span for operand 0']
    #allocation1 [shape = 'u8[32768]{0}', space=vmem, size = 0x8000, scoped, tag = 'operand span for operand 1']
    %s2 = scalar_lea.vmem [#allocation0], 8
    // Predicated region
    $region2: #{reverse.0} parent=1 // pred_check
      _
    $region3: #{reverse.0} parent=1 // pred_check_branch
      %4 = sbr.rel (0) target = $region5
    $region4: #{reverse.0} parent=1 // pred_region
      // Predicated region
      $region6: #{reverse.0} parent=4 // pred_check
        _
      $region7: #{reverse.0} parent=4 // pred_check_branch
        %6 = sbr.rel (0) target = $region9
      $region8: #{reverse.0} parent=4 // pred_region
        // Predicated region
        $region21: #{reverse.0} parent=8 // pred_check
          _
        $region22: #{reverse.0} parent=8 // pred_check_branch
          %35 = sbr.rel (0) target = $region24
        $region23: #{reverse.0} parent=8 // pred_region
          loop: start=0, step=1, limit=1
          $region25: #{reverse.0} parent=23 // loop_pre_header
            _
          $region26: #{reverse.0} parent=23 // loop_header
            %s37 = sphi 0, %s41
            %p38 = scmp.ge.s32.totalorder %s37, 1
            %s42 = sphi %s0, %s0
            %s43 = sphi %s2, %s2
          $region27: #{reverse.0} parent=23 // loop_header_branch
            %40 = sbr.rel (%p38) target = $region31
          $region28: #{reverse.0} parent=23 // loop_body
            %v44 = vld [vmem:[%s42] sm:$0xff]
            %45 = vst [vmem:[%s43] sm:$0xff] %v44
            %v46 = vld [vmem:[%s42 + $0x8] sm:$0xff]
            %47 = vst [vmem:[%s43 + $0x10] sm:$0xff] %v46
            %v48 = vld [vmem:[%s42 + $0x10] sm:$0xff]
            %49 = vst [vmem:[%s43 + $0x20] sm:$0xff] %v48
            %v50 = vld [vmem:[%s42 + $0x18] sm:$0xff]
            %51 = vst [vmem:[%s43 + $0x30] sm:$0xff] %v50
            %v52 = vld [vmem:[%s42 + $0x20] sm:$0xff]
            %53 = vst [vmem:[%s43 + $0x40] sm:$0xff] %v52
            %v54 = vld [vmem:[%s42 + $0x28] sm:$0xff]
            %55 = vst [vmem:[%s43 + $0x50] sm:$0xff] %v54
            %v56 = vld [vmem:[%s42 + $0x30] sm:$0xff]
            %57 = vst [vmem:[%s43 + $0x60] sm:$0xff] %v56
            %v58 = vld [vmem:[%s42 + $0x38] sm:$0xff]
            %59 = vst [vmem:[%s43 + $0x70] sm:$0xff] %v58
          $region29: #{reverse.0} parent=23 // loop_footer
            %s41 = sadd.s32 1, %s37
          $region30: #{reverse.0} parent=23 // loop_footer_branch
            %36 = sbr.rel target = $region26
          $region31: #{reverse.0} parent=23 // loop_exit
            _
        $region24: #{reverse.0} parent=8 // pred_fallthru
          _
        // Predicated region
        $region32: #{reverse.0} parent=8 // pred_check
          _
        $region33: #{reverse.0} parent=8 // pred_check_branch
          %61 = sbr.rel target = $region35
        $region34: #{reverse.0} parent=8 // pred_region
          _
        $region35: #{reverse.0} parent=8 // pred_fallthru
          _
      $region9: #{reverse.0} parent=4 // pred_fallthru
        _
      // Predicated region
      $region10: #{reverse.0} parent=4 // pred_check
        _
      $region11: #{reverse.0} parent=4 // pred_check_branch
        %8 = sbr.rel target = $region13
      $region12: #{reverse.0} parent=4 // pred_region
        loop: start=0, step=1, limit=1
        $region14: #{reverse.0} parent=12 // loop_pre_header
          _
        $region15: #{reverse.0} parent=12 // loop_header
          %s11 = sphi 0, %s15
          %p12 = scmp.ge.s32.totalorder %s11, 1
          %s16 = sphi %s0, %s0
          %s17 = sphi %s2, %s2
        $region16: #{reverse.0} parent=12 // loop_header_branch
          %14 = sbr.rel (%p12) target = $region20
        $region17: #{reverse.0} parent=12 // loop_body
          %v18 = vld [vmem:[%s16] sm:$0xff]
          %19 = vst [vmem:[%s17] sm:$0xff] %v18
          %v20 = vld [vmem:[%s16 + $0x8] sm:$0xff]
          %21 = vst [vmem:[%s17 + $0x10] sm:$0xff] %v20
          %v22 = vld [vmem:[%s16 + $0x10] sm:$0xff]
          %23 = vst [vmem:[%s17 + $0x20] sm:$0xff] %v22
          %v24 = vld [vmem:[%s16 + $0x18] sm:$0xff]
          %25 = vst [vmem:[%s17 + $0x30] sm:$0xff] %v24
          %v26 = vld [vmem:[%s16 + $0x20] sm:$0xff]
          %27 = vst [vmem:[%s17 + $0x40] sm:$0xff] %v26
          %v28 = vld [vmem:[%s16 + $0x28] sm:$0xff]
          %29 = vst [vmem:[%s17 + $0x50] sm:$0xff] %v28
          %v30 = vld [vmem:[%s16 + $0x30] sm:$0xff]
          %31 = vst [vmem:[%s17 + $0x60] sm:$0xff] %v30
          %v32 = vld [vmem:[%s16 + $0x38] sm:$0xff]
          %33 = vst [vmem:[%s17 + $0x70] sm:$0xff] %v32
        $region18: #{reverse.0} parent=12 // loop_footer
          %s15 = sadd.s32 1, %s11
        $region19: #{reverse.0} parent=12 // loop_footer_branch
          %10 = sbr.rel target = $region15
        $region20: #{reverse.0} parent=12 // loop_exit
          _
      $region13: #{reverse.0} parent=4 // pred_fallthru
        _
    $region5: #{reverse.0} parent=1 // pred_fallthru
      _
    %62 = vnop
    %s63 = scalar_lea.vmem [#allocation0], 7
    %v64 = vld [vmem:[%s63] ss:$-1 sm:$0xff]
    %v65 = vrot.slane %v64, 1
    %66 = vst [vmem:[#allocation1] sm:$0xff] %v65
    %s67 = scalar_lea.vmem [#allocation0], 8
    %s68 = scalar_lea.vmem %s67, 7 [#allocation0]
    %v69 = vld [vmem:[%s68] ss:$-1 sm:$0xff]
    %v70 = vrot.slane %v69, 1
    %v71 = vlaneseq
    %v72 = vshrl.u32 %v71, 7
    %vm73 = vcmp.lt.s32.totalorder %v72, 7
    %74 = vst.msk [vmem:[#allocation1] sm:$0xff] %vm73, %v70
    %s75 = scalar_lea.vmem [#allocation1], 8
    %s76 = scalar_lea.vmem [#allocation0], 16
    %s77 = scalar_lea.vmem %s76, 7 [#allocation0]
    %v78 = vld [vmem:[%s77] ss:$-1 sm:$0xff]
    %v79 = vrot.slane %v78, 1
    %80 = vst [vmem:[%s75] sm:$0xff] %v79
    %s81 = scalar_lea.vmem %s76, 8 [#allocation0]
    %s82 = scalar_lea.vmem %s81, 7 [#allocation0]
    %v83 = vld [vmem:[%s82] ss:$-1 sm:$0xff]
    %v84 = vrot.slane %v83, 1
    %v85 = vlaneseq
    %v86 = vshrl.u32 %v85, 7
    %vm87 = vcmp.lt.s32.totalorder %v86, 7
    %88 = vst.msk [vmem:[%s75] sm:$0xff] %vm87, %v84
    %s89 = scalar_lea.vmem [#allocation1], 16
    %s90 = scalar_lea.vmem [#allocation0], 32
    %s91 = scalar_lea.vmem %s90, 7 [#allocation0]
    %v92 = vld [vmem:[%s91] ss:$-1 sm:$0xff]
    %v93 = vrot.slane %v92, 1
    %94 = vst [vmem:[%s89] sm:$0xff] %v93
    %s95 = scalar_lea.vmem %s90, 8 [#allocation0]
    %s96 = scalar_lea.vmem %s95, 7 [#allocation0]
    %v97 = vld [vmem:[%s96] ss:$-1 sm:$0xff]
    %v98 = vrot.slane %v97, 1
    %v99 = vlaneseq
    %v100 = vshrl.u32 %v99, 7
    %vm101 = vcmp.lt.s32.totalorder %v100, 7
    %102 = vst.msk [vmem:[%s89] sm:$0xff] %vm101, %v98
    %s103 = scalar_lea.vmem [#allocation1], 24
    %s104 = scalar_lea.vmem [#allocation0], 48
    %s105 = scalar_lea.vmem %s104, 7 [#allocation0]
    %v106 = vld [vmem:[%s105] ss:$-1 sm:$0xff]
    %v107 = vrot.slane %v106, 1
    %108 = vst [vmem:[%s103] sm:$0xff] %v107
    %s109 = scalar_lea.vmem %s104, 8 [#allocation0]
    %s110 = scalar_lea.vmem %s109, 7 [#allocation0]
    %v111 = vld [vmem:[%s110] ss:$-1 sm:$0xff]
    %v112 = vrot.slane %v111, 1
    %v113 = vlaneseq
    %v114 = vshrl.u32 %v113, 7
    %vm115 = vcmp.lt.s32.totalorder %v114, 7
    %116 = vst.msk [vmem:[%s103] sm:$0xff] %vm115, %v112
    %s117 = scalar_lea.vmem [#allocation1], 32
    %s118 = scalar_lea.vmem [#allocation0], 64
    %s119 = scalar_lea.vmem %s118, 7 [#allocation0]
    %v120 = vld [vmem:[%s119] ss:$-1 sm:$0xff]
    %v121 = vrot.slane %v120, 1
    %122 = vst [vmem:[%s117] sm:$0xff] %v121
    %s123 = scalar_lea.vmem %s118, 8 [#allocation0]
    %s124 = scalar_lea.vmem %s123, 7 [#allocation0]
    %v125 = vld [vmem:[%s124] ss:$-1 sm:$0xff]
    %v126 = vrot.slane %v125, 1
    %v127 = vlaneseq
    %v128 = vshrl.u32 %v127, 7
    %vm129 = vcmp.lt.s32.totalorder %v128, 7
    %130 = vst.msk [vmem:[%s117] sm:$0xff] %vm129, %v126
    %s131 = scalar_lea.vmem [#allocation1], 40
    %s132 = scalar_lea.vmem [#allocation0], 80
    %s133 = scalar_lea.vmem %s132, 7 [#allocation0]
    %v134 = vld [vmem:[%s133] ss:$-1 sm:$0xff]
    %v135 = vrot.slane %v134, 1
    %136 = vst [vmem:[%s131] sm:$0xff] %v135
    %s137 = scalar_lea.vmem %s132, 8 [#allocation0]
    %s138 = scalar_lea.vmem %s137, 7 [#allocation0]
    %v139 = vld [vmem:[%s138] ss:$-1 sm:$0xff]
    %v140 = vrot.slane %v139, 1
    %v141 = vlaneseq
    %v142 = vshrl.u32 %v141, 7
    %vm143 = vcmp.lt.s32.totalorder %v142, 7
    %144 = vst.msk [vmem:[%s131] sm:$0xff] %vm143, %v140
    %s145 = scalar_lea.vmem [#allocation1], 48
    %s146 = scalar_lea.vmem [#allocation0], 96
    %s147 = scalar_lea.vmem %s146, 7 [#allocation0]
    %v148 = vld [vmem:[%s147] ss:$-1 sm:$0xff]
    %v149 = vrot.slane %v148, 1
    %150 = vst [vmem:[%s145] sm:$0xff] %v149
    %s151 = scalar_lea.vmem %s146, 8 [#allocation0]
    %s152 = scalar_lea.vmem %s151, 7 [#allocation0]
    %v153 = vld [vmem:[%s152] ss:$-1 sm:$0xff]
    %v154 = vrot.slane %v153, 1
    %v155 = vlaneseq
    %v156 = vshrl.u32 %v155, 7
    %vm157 = vcmp.lt.s32.totalorder %v156, 7
    %158 = vst.msk [vmem:[%s145] sm:$0xff] %vm157, %v154
    %s159 = scalar_lea.vmem [#allocation1], 56
    %s160 = scalar_lea.vmem [#allocation0], 112
    %s161 = scalar_lea.vmem %s160, 7 [#allocation0]
    %v162 = vld [vmem:[%s161] ss:$-1 sm:$0xff]
    %v163 = vrot.slane %v162, 1
    %164 = vst [vmem:[%s159] sm:$0xff] %v163
    %s165 = scalar_lea.vmem %s160, 8 [#allocation0]
    %s166 = scalar_lea.vmem %s165, 7 [#allocation0]
    %v167 = vld [vmem:[%s166] ss:$-1 sm:$0xff]
    %v168 = vrot.slane %v167, 1
    %v169 = vlaneseq
    %v170 = vshrl.u32 %v169, 7
    %vm171 = vcmp.lt.s32.totalorder %v170, 7
    %172 = vst.msk [vmem:[%s159] sm:$0xff] %vm171, %v168
    // Predicated region
    $region36: #{reverse.0} parent=1 // pred_check
      _
    $region37: #{reverse.0} parent=1 // pred_check_branch
      %174 = sbr.rel (0) target = $region39
    $region38: #{reverse.0} parent=1 // pred_region
      // Predicated region
      $region40: #{reverse.0} parent=38 // pred_check
        _
      $region41: #{reverse.0} parent=38 // pred_check_branch
        %176 = sbr.rel (0) target = $region43
      $region42: #{reverse.0} parent=38 // pred_region
        // Predicated region
        $region55: #{reverse.0} parent=42 // pred_check
          _
        $region56: #{reverse.0} parent=42 // pred_check_branch
          %205 = sbr.rel (0) target = $region58
        $region57: #{reverse.0} parent=42 // pred_region
          loop: start=0, step=1, limit=1
          $region59: #{reverse.0} parent=57 // loop_pre_header
            _
          $region60: #{reverse.0} parent=57 // loop_header
            %s207 = sphi 0, %s211
            %p208 = scmp.ge.s32.totalorder %s207, 1
            %s212 = sphi [#allocation1], [#allocation1]
            %s213 = sphi %s1, %s1
          $region61: #{reverse.0} parent=57 // loop_header_branch
            %210 = sbr.rel (%p208) target = $region65
          $region62: #{reverse.0} parent=57 // loop_body
            %v214 = vld [vmem:[%s212] sm:$0xff]
            %215 = vst [vmem:[%s213] sm:$0xff] %v214
            %v216 = vld [vmem:[%s212 + $0x8] sm:$0xff]
            %217 = vst [vmem:[%s213 + $0x8] sm:$0xff] %v216
            %v218 = vld [vmem:[%s212 + $0x10] sm:$0xff]
            %219 = vst [vmem:[%s213 + $0x10] sm:$0xff] %v218
            %v220 = vld [vmem:[%s212 + $0x18] sm:$0xff]
            %221 = vst [vmem:[%s213 + $0x18] sm:$0xff] %v220
            %v222 = vld [vmem:[%s212 + $0x20] sm:$0xff]
            %223 = vst [vmem:[%s213 + $0x20] sm:$0xff] %v222
            %v224 = vld [vmem:[%s212 + $0x28] sm:$0xff]
            %225 = vst [vmem:[%s213 + $0x28] sm:$0xff] %v224
            %v226 = vld [vmem:[%s212 + $0x30] sm:$0xff]
            %227 = vst [vmem:[%s213 + $0x30] sm:$0xff] %v226
            %v228 = vld [vmem:[%s212 + $0x38] sm:$0xff]
            %229 = vst [vmem:[%s213 + $0x38] sm:$0xff] %v228
          $region63: #{reverse.0} parent=57 // loop_footer
            %s211 = sadd.s32 1, %s207
          $region64: #{reverse.0} parent=57 // loop_footer_branch
            %206 = sbr.rel target = $region60
          $region65: #{reverse.0} parent=57 // loop_exit
            _
        $region58: #{reverse.0} parent=42 // pred_fallthru
          _
        // Predicated region
        $region66: #{reverse.0} parent=42 // pred_check
          _
        $region67: #{reverse.0} parent=42 // pred_check_branch
          %231 = sbr.rel target = $region69
        $region68: #{reverse.0} parent=42 // pred_region
          _
        $region69: #{reverse.0} parent=42 // pred_fallthru
          _
      $region43: #{reverse.0} parent=38 // pred_fallthru
        _
      // Predicated region
      $region44: #{reverse.0} parent=38 // pred_check
        _
      $region45: #{reverse.0} parent=38 // pred_check_branch
        %178 = sbr.rel target = $region47
      $region46: #{reverse.0} parent=38 // pred_region
        loop: start=0, step=1, limit=1
        $region48: #{reverse.0} parent=46 // loop_pre_header
          _
        $region49: #{reverse.0} parent=46 // loop_header
          %s181 = sphi 0, %s185
          %p182 = scmp.ge.s32.totalorder %s181, 1
          %s186 = sphi [#allocation1], [#allocation1]
          %s187 = sphi %s1, %s1
        $region50: #{reverse.0} parent=46 // loop_header_branch
          %184 = sbr.rel (%p182) target = $region54
        $region51: #{reverse.0} parent=46 // loop_body
          %v188 = vld [vmem:[%s186] sm:$0xff]
          %189 = vst [vmem:[%s187] sm:$0xff] %v188
          %v190 = vld [vmem:[%s186 + $0x8] sm:$0xff]
          %191 = vst [vmem:[%s187 + $0x8] sm:$0xff] %v190
          %v192 = vld [vmem:[%s186 + $0x10] sm:$0xff]
          %193 = vst [vmem:[%s187 + $0x10] sm:$0xff] %v192
          %v194 = vld [vmem:[%s186 + $0x18] sm:$0xff]
          %195 = vst [vmem:[%s187 + $0x18] sm:$0xff] %v194
          %v196 = vld [vmem:[%s186 + $0x20] sm:$0xff]
          %197 = vst [vmem:[%s187 + $0x20] sm:$0xff] %v196
          %v198 = vld [vmem:[%s186 + $0x28] sm:$0xff]
          %199 = vst [vmem:[%s187 + $0x28] sm:$0xff] %v198
          %v200 = vld [vmem:[%s186 + $0x30] sm:$0xff]
          %201 = vst [vmem:[%s187 + $0x30] sm:$0xff] %v200
          %v202 = vld [vmem:[%s186 + $0x38] sm:$0xff]
          %203 = vst [vmem:[%s187 + $0x38] sm:$0xff] %v202
        $region52: #{reverse.0} parent=46 // loop_footer
          %s185 = sadd.s32 1, %s181
        $region53: #{reverse.0} parent=46 // loop_footer_branch
          %180 = sbr.rel target = $region49
        $region54: #{reverse.0} parent=46 // loop_exit
          _
      $region47: #{reverse.0} parent=38 // pred_fallthru
        _
    $region39: #{reverse.0} parent=1 // pred_fallthru
      _
    %232 = vnop

</llo_original>
